<compile_context>
chip_gen: v6e
topology: v6e:2x2x1
jax: 0.10.0
libtpu: 0.0.40
codegen_flags: <defaults>
</compile_context>

<pallas_src>
import math

import jax
import jax.numpy as jnp
from jax.experimental import pallas as pl
from jax.experimental.pallas import tpu as pltpu


# ----------------------------- Pallas kernel --------------------------------


def decoder_entropy_kernel(x_ref, w1_ref, b1_ref, w2_ref, b2_ref, w3_ref,
                           b3_ref, o_ref):
    # linear1 + ReLU   : [TM,128] @ [128,64] -> [TM,64]
    h = jnp.dot(x_ref[...], w1_ref[...],
                preferred_element_type=jnp.float32) + b1_ref[...]
    h = jnp.maximum(h, 0.0)
    # linear2 + ReLU   : [TM,64] @ [64,32] -> [TM,32]
    h = jnp.dot(h, w2_ref[...],
                preferred_element_type=jnp.float32) + b2_ref[...]
    h = jnp.maximum(h, 0.0)
    # linear3 + Sigmoid: [TM,32] @ [32,1] -> [TM,1]
    z = jnp.dot(h, w3_ref[...],
                preferred_element_type=jnp.float32) + b3_ref[...]
    o_ref[...] = 1.0 / (1.0 + jnp.exp(-z))


# ----------------------------- wrapper ---------------------------------------


def _round_up(v, m):
    return ((v + m - 1) // m) * m


def decoder_entropy(x, params, *, block_rows=128, single_shot_rows=512):
    """x: [n_nodes, 128] float32 -> [n_nodes, 1] float32."""
    w1, b1 = params["linear1"]
    w2, b2 = params["linear2"]
    w3, b3 = params["linear3"]
    n, d = x.shape

    if _round_up(n, 8) <= single_shot_rows:
        # ---- small-N path: single shot, whole arrays resident in VMEM ----
        n_pad = max(_round_up(n, 8), 8)
        x_p = x if n_pad == n else jnp.pad(x, ((0, n_pad - n), (0, 0)))
        vmem = pl.BlockSpec(memory_space=pltpu.MemorySpace.VMEM)
        out = pl.pallas_call(
            decoder_entropy_kernel,
            out_shape=jax.ShapeDtypeStruct((n_pad, 1), jnp.float32),
            in_specs=[vmem] * 7,
            out_specs=vmem,
        )(x_p, w1, b1, w2, b2, w3, b3)
    else:
        # ---- large-N path: row-tiled grid, parallel over tiles ------------
        n_pad = _round_up(n, block_rows)
        x_p = x if n_pad == n else jnp.pad(x, ((0, n_pad - n), (0, 0)))
        grid = (n_pad // block_rows,)

        def full_spec(shape):
            return pl.BlockSpec(shape, lambda i: (0, 0))

        out = pl.pallas_call(
            decoder_entropy_kernel,
            out_shape=jax.ShapeDtypeStruct((n_pad, 1), jnp.float32),
            grid=grid,
            in_specs=[
                pl.BlockSpec((block_rows, d), lambda i: (i, 0)),
                full_spec(w1.shape), full_spec(b1.shape),
                full_spec(w2.shape), full_spec(b2.shape),
                full_spec(w3.shape), full_spec(b3.shape),
            ],
            out_specs=pl.BlockSpec((block_rows, 1), lambda i: (i, 0)),
            compiler_params=pltpu.CompilerParams(
                dimension_semantics=("parallel",)),
        )(x_p, w1, b1, w2, b2, w3, b3)

    return out[:n]


# ----------------------------- parameter init --------------------------------


def init_linear(key, fin, fout):
    kw, kb = jax.random.split(key)
    bound = 1.0 / math.sqrt(fin)
    w = jax.random.uniform(kw, (fin, fout), jnp.float32, -bound, bound)
    b = jax.random.uniform(kb, (1, fout), jnp.float32, -bound, bound)
    return w, b


def init_decoder_entropy(key, hidden_dim=128):
    k1, k2, k3 = jax.random.split(key, 3)
    return {
        "linear1": init_linear(k1, hidden_dim, hidden_dim // 2),
        "linear2": init_linear(k2, hidden_dim // 2, hidden_dim // 4),
        "linear3": init_linear(k3, hidden_dim // 4, 1),
    }


# ----------------------------- pure-JAX reference ----------------------------


def _ref_decoder_entropy(x, params):
    w1, b1 = params["linear1"]
    w2, b2 = params["linear2"]
    w3, b3 = params["linear3"]
    h = jnp.maximum(x @ w1 + b1, 0.0)
    h = jnp.maximum(h @ w2 + b2, 0.0)
    z = h @ w3 + b3
    return 1.0 / (1.0 + jnp.exp(-z))


# ----------------------------- driver ----------------------------------------


if __name__ == "__main__":
    HIDDEN = 128

    key = jax.random.PRNGKey(0)
    k_small, k_large, k_params = jax.random.split(key, 3)
    params = init_decoder_entropy(k_params, HIDDEN)

    # Small-N case (exercises the no-grid, whole-array-in-VMEM path).
    n_small = 10
    x_small = jax.random.normal(k_small, (n_small, HIDDEN), jnp.float32)
    out_small = jax.block_until_ready(decoder_entropy(x_small, params))
    ref_small = _ref_decoder_entropy(x_small, params)
    assert out_small.shape == (n_small, 1)
    assert jnp.all(jnp.isfinite(out_small))
    assert jnp.allclose(out_small, ref_small, atol=2e-3, rtol=2e-3), \
        float(jnp.max(jnp.abs(out_small - ref_small)))

    # Larger-N case (exercises the row-tiled parallel grid path).
    n_large = 640
    x_large = jax.random.normal(k_large, (n_large, HIDDEN), jnp.float32)
    out_large = jax.block_until_ready(decoder_entropy(x_large, params))
    ref_large = _ref_decoder_entropy(x_large, params)
    assert out_large.shape == (n_large, 1)
    assert jnp.all(jnp.isfinite(out_large))
    assert jnp.allclose(out_large, ref_large, atol=2e-3, rtol=2e-3), \
        float(jnp.max(jnp.abs(out_large - ref_large)))

    print("KERNEL_OK")
</pallas_src>

<mosaic_0001>
module attributes {stable_mosaic.version = 11 : i64} {
  func.func @decoder_entropy_kernel(%arg0: memref<16x128xf32, #tpu.memory_space<vmem>>, %arg1: memref<128x64xf32, #tpu.memory_space<vmem>>, %arg2: memref<1x64xf32, #tpu.memory_space<vmem>>, %arg3: memref<64x32xf32, #tpu.memory_space<vmem>>, %arg4: memref<1x32xf32, #tpu.memory_space<vmem>>, %arg5: memref<32x1xf32, #tpu.memory_space<vmem>>, %arg6: memref<1x1xf32, #tpu.memory_space<vmem>>, %arg7: memref<16x1xf32, #tpu.memory_space<vmem>>) attributes {dimension_semantics = [], scalar_prefetch = 0 : i64, scratch_operands = 0 : i64, tpu.core_type = #tpu.core_type<tc>} {
    %c0 = arith.constant 0 : index
    %c0_0 = arith.constant 0 : index
    %0 = vector.load %arg0[%c0, %c0_0] : memref<16x128xf32, #tpu.memory_space<vmem>>, vector<16x128xf32>
    %c0_1 = arith.constant 0 : index
    %c0_2 = arith.constant 0 : index
    %1 = vector.load %arg1[%c0_1, %c0_2] : memref<128x64xf32, #tpu.memory_space<vmem>>, vector<128x64xf32>
    %cst = arith.constant dense<0.000000e+00> : vector<16x64xf32>
    %2 = tpu.matmul %0, %1, %cst {dimension_numbers = #tpu.dot_dimension_numbers<[1], [0], [0], [1], [0, 0, 1, 1], [], []>} : vector<16x128xf32>, vector<128x64xf32>, vector<16x64xf32> -> vector<16x64xf32>
    %c0_3 = arith.constant 0 : index
    %c0_4 = arith.constant 0 : index
    %3 = vector.load %arg2[%c0_3, %c0_4] : memref<1x64xf32, #tpu.memory_space<vmem>>, vector<1x64xf32>
    %4 = vector.broadcast %3 : vector<1x64xf32> to vector<16x64xf32>
    %5 = arith.addf %2, %4 : vector<16x64xf32>
    %cst_5 = arith.constant 0.000000e+00 : f32
    %6 = vector.broadcast %cst_5 : f32 to vector<16x64xf32>
    %7 = arith.maximumf %5, %6 : vector<16x64xf32>
    %c0_6 = arith.constant 0 : index
    %c0_7 = arith.constant 0 : index
    %8 = vector.load %arg3[%c0_6, %c0_7] : memref<64x32xf32, #tpu.memory_space<vmem>>, vector<64x32xf32>
    %cst_8 = arith.constant dense<0.000000e+00> : vector<16x32xf32>
    %9 = tpu.matmul %7, %8, %cst_8 {dimension_numbers = #tpu.dot_dimension_numbers<[1], [0], [0], [1], [0, 0, 1, 1], [], []>} : vector<16x64xf32>, vector<64x32xf32>, vector<16x32xf32> -> vector<16x32xf32>
    %c0_9 = arith.constant 0 : index
    %c0_10 = arith.constant 0 : index
    %10 = vector.load %arg4[%c0_9, %c0_10] : memref<1x32xf32, #tpu.memory_space<vmem>>, vector<1x32xf32>
    %11 = vector.broadcast %10 : vector<1x32xf32> to vector<16x32xf32>
    %12 = arith.addf %9, %11 : vector<16x32xf32>
    %cst_11 = arith.constant 0.000000e+00 : f32
    %13 = vector.broadcast %cst_11 : f32 to vector<16x32xf32>
    %14 = arith.maximumf %12, %13 : vector<16x32xf32>
    %c0_12 = arith.constant 0 : index
    %c0_13 = arith.constant 0 : index
    %15 = vector.load %arg5[%c0_12, %c0_13] : memref<32x1xf32, #tpu.memory_space<vmem>>, vector<32x1xf32>
    %cst_14 = arith.constant dense<0.000000e+00> : vector<16x1xf32>
    %16 = tpu.matmul %14, %15, %cst_14 {dimension_numbers = #tpu.dot_dimension_numbers<[1], [0], [0], [1], [0, 0, 1, 1], [], []>} : vector<16x32xf32>, vector<32x1xf32>, vector<16x1xf32> -> vector<16x1xf32>
    %c0_15 = arith.constant 0 : index
    %c0_16 = arith.constant 0 : index
    %17 = vector.load %arg6[%c0_15, %c0_16] : memref<1x1xf32, #tpu.memory_space<vmem>>, vector<1x1xf32>
    %18 = vector.broadcast %17 : vector<1x1xf32> to vector<16x1xf32>
    %19 = arith.addf %16, %18 : vector<16x1xf32>
    %cst_17 = arith.constant 0.000000e+00 : f32
    %20 = vector.broadcast %cst_17 : f32 to vector<16x1xf32>
    %21 = arith.subf %20, %19 : vector<16x1xf32>
    %22 = math.exp %21 : vector<16x1xf32>
    %cst_18 = arith.constant 1.000000e+00 : f32
    %23 = vector.broadcast %cst_18 : f32 to vector<16x1xf32>
    %24 = arith.addf %23, %22 : vector<16x1xf32>
    %cst_19 = arith.constant 1.000000e+00 : f32
    %25 = vector.broadcast %cst_19 : f32 to vector<16x1xf32>
    %26 = arith.divf %25, %24 : vector<16x1xf32>
    %c0_20 = arith.constant 0 : index
    %c0_21 = arith.constant 0 : index
    %27 = vector.load %arg7[%c0_20, %c0_21] : memref<16x1xf32, #tpu.memory_space<vmem>>, vector<16x1xf32>
    tpu.vector_store %arg7[%c0_20, %c0_21], %26 {strides = array<i32>} : memref<16x1xf32, #tpu.memory_space<vmem>>, vector<16x1xf32>,
    return
  }
}

</mosaic_0001>

<llo_original>
// kernel: tpu_custom_call.1
$region0: #{tpu_custom_call.1}
  #allocation0 [shape = 'u32[]', space=smem, size = 0x4, offset = 0x4, fixed_abs, tag = 'smem constant byte address 0x4 - core index']
  #allocation1 [shape = 'u32[144,128]{1,0:T(1,128)}', space=vmem, size = 0x12000, scoped, tag = 'internal scratch']
  #allocation2 [shape = 'f32[1,1]{1,0:T(1,128)S(1)}', space=vmem, size = 0x200, scoped, tag = 'scoped memory for tpu_custom_call.1']
  %s0 = inlined_call_operand.vmem [shape: f32[16,128], index: 0, kind: input, shape index: {}]
  %s1 = inlined_call_operand.vmem [shape: f32[128,64], index: 1, kind: input, shape index: {}]
  %s2 = inlined_call_operand.vmem [shape: f32[1,64], index: 2, kind: input, shape index: {}]
  %s3 = inlined_call_operand.vmem [shape: f32[64,32], index: 3, kind: input, shape index: {}]
  %s4 = inlined_call_operand.vmem [shape: f32[1,32], index: 4, kind: input, shape index: {}]
  %s5 = inlined_call_operand.vmem [shape: f32[32,1], index: 5, kind: input, shape index: {}]
  %s6 = inlined_call_operand.<no memory space> [shape: f32[1,1], index: 6, kind: input, shape index: {}]
  %s7 = inlined_call_operand.vmem [shape: f32[16,1], index: 7, kind: output, shape index: {}]
  %s8 = sld [smem:[#allocation0]]
  $region38: #{tpu_custom_call.1} parent=0
    _
  %s10 = ssub.s32 1, %s8
  %s11 = scalar_select 0, %s10, %s8
  %v12 = vstv %s6
  %13 = vst [vmem:[#allocation2] sm:$0x1] %v12
  // Predicated region
  $region2: #{tpu_custom_call.1} parent=0 // pred_check
    _
  $region3: #{tpu_custom_call.1} parent=0 // pred_check_branch
    %15 = sbr.rel (0) target = $region5
  $region4: #{tpu_custom_call.1} parent=0 // pred_region
    _
  $region5: #{tpu_custom_call.1} parent=0 // pred_fallthru
    _
  // Predicated region
  $region6: #{tpu_custom_call.1} parent=0 // pred_check
    _
  $region7: #{tpu_custom_call.1} parent=0 // pred_check_branch
    %17 = sbr.rel (0) target = $region9
  $region8: #{tpu_custom_call.1} parent=0 // pred_region
    _
  $region9: #{tpu_custom_call.1} parent=0 // pred_fallthru
    _
  // Predicated region
  $region10: #{tpu_custom_call.1} parent=0 // pred_check
    _
  $region11: #{tpu_custom_call.1} parent=0 // pred_check_branch
    %19 = sbr.rel (0) target = $region13
  $region12: #{tpu_custom_call.1} parent=0 // pred_region
    _
  $region13: #{tpu_custom_call.1} parent=0 // pred_fallthru
    _
  // Predicated region
  $region14: #{tpu_custom_call.1} parent=0 // pred_check
    _
  $region15: #{tpu_custom_call.1} parent=0 // pred_check_branch
    %21 = sbr.rel (0) target = $region17
  $region16: #{tpu_custom_call.1} parent=0 // pred_region
    _
  $region17: #{tpu_custom_call.1} parent=0 // pred_fallthru
    _
  // Predicated region
  $region18: #{tpu_custom_call.1} parent=0 // pred_check
    _
  $region19: #{tpu_custom_call.1} parent=0 // pred_check_branch
    %23 = sbr.rel (0) target = $region21
  $region20: #{tpu_custom_call.1} parent=0 // pred_region
    _
  $region21: #{tpu_custom_call.1} parent=0 // pred_fallthru
    _
  // Predicated region
  $region22: #{tpu_custom_call.1} parent=0 // pred_check
    _
  $region23: #{tpu_custom_call.1} parent=0 // pred_check_branch
    %25 = sbr.rel (0) target = $region25
  $region24: #{tpu_custom_call.1} parent=0 // pred_region
    _
  $region25: #{tpu_custom_call.1} parent=0 // pred_fallthru
    _
  // Predicated region
  $region26: #{tpu_custom_call.1} parent=0 // pred_check
    _
  $region27: #{tpu_custom_call.1} parent=0 // pred_check_branch
    %27 = sbr.rel (0) target = $region29
  $region28: #{tpu_custom_call.1} parent=0 // pred_region
    _
  $region29: #{tpu_custom_call.1} parent=0 // pred_fallthru
    _
  %v28 = vld [vmem:[%s0] sm:$0xff]
  %v29 = vld [vmem:[%s0 + $0x8] sm:$0xff]
  %v30 = vld [vmem:[%s1] sm:$0xff]
  %v31 = vld [vmem:[%s1 + $0x8] sm:$0xff]
  %v32 = vld [vmem:[%s1 + $0x10] sm:$0xff]
  %v33 = vld [vmem:[%s1 + $0x18] sm:$0xff]
  %v34 = vld [vmem:[%s1 + $0x20] sm:$0xff]
  %v35 = vld [vmem:[%s1 + $0x28] sm:$0xff]
  %v36 = vld [vmem:[%s1 + $0x30] sm:$0xff]
  %v37 = vld [vmem:[%s1 + $0x38] sm:$0xff]
  %v38 = vld [vmem:[%s1 + $0x40] sm:$0xff]
  %v39 = vld [vmem:[%s1 + $0x48] sm:$0xff]
  %v40 = vld [vmem:[%s1 + $0x50] sm:$0xff]
  %v41 = vld [vmem:[%s1 + $0x58] sm:$0xff]
  %v42 = vld [vmem:[%s1 + $0x60] sm:$0xff]
  %v43 = vld [vmem:[%s1 + $0x68] sm:$0xff]
  %v44 = vld [vmem:[%s1 + $0x70] sm:$0xff]
  %v45 = vld [vmem:[%s1 + $0x78] sm:$0xff]
  %v46 = vld [vmem:[%s2] sm:$0x1]
  %v48 = vlaneseq
  %v49 = vshrl.u32 %v48, 7
  %v50 = vsub.s32 0, %v49
  %v51 = vrot.slane %v46, %v50
  %53 = vmatprep.subr.mxu0 0.0
  %54 = vmatpush1.msra.mxu0 %v45
  %55 = vmatprep.subr.mxu0 0.0
  %56 = vmatpush1.msra.mxu0 %v44
  %57 = vmatprep.subr.mxu0 0.0
  %58 = vmatpush1.msra.mxu0 %v43
  %59 = vmatprep.subr.mxu0 0.0
  %60 = vmatpush1.msra.mxu0 %v42
  %61 = vmatprep.subr.mxu0 0.0
  %62 = vmatpush1.msra.mxu0 %v41
  %63 = vmatprep.subr.mxu0 0.0
  %64 = vmatpush1.msra.mxu0 %v40
  %65 = vmatprep.subr.mxu0 0.0
  %66 = vmatpush1.msra.mxu0 %v39
  %67 = vmatprep.subr.mxu0 0.0
  %68 = vmatpush1.msra.mxu0 %v38
  %69 = vmatprep.subr.mxu0 0.0
  %70 = vmatpush1.msra.mxu0 %v37
  %71 = vmatprep.subr.mxu0 0.0
  %72 = vmatpush1.msra.mxu0 %v36
  %73 = vmatprep.subr.mxu0 0.0
  %74 = vmatpush1.msra.mxu0 %v35
  %75 = vmatprep.subr.mxu0 0.0
  %76 = vmatpush1.msra.mxu0 %v34
  %77 = vmatprep.subr.mxu0 0.0
  %78 = vmatpush1.msra.mxu0 %v33
  %79 = vmatprep.subr.mxu0 0.0
  %80 = vmatpush1.msra.mxu0 %v32
  %81 = vmatprep.subr.mxu0 0.0
  %82 = vmatpush1.msra.mxu0 %v31
  %83 = vmatprep.subr.mxu0 0.0
  %84 = vmatpush1.msra.mxu0 %v30
  %85 = vmatprep.subr.mxu0 0.0
  %86 = vmatpush2.msra.mxu0 0.0
  %87 = vmatprep.subr.mxu0 0.0
  %88 = vmatpush2.msra.mxu0 0.0
  %89 = vmatprep.subr.mxu0 0.0
  %90 = vmatpush2.msra.mxu0 0.0
  %91 = vmatprep.subr.mxu0 0.0
  %92 = vmatpush2.msra.mxu0 0.0
  %93 = vmatprep.subr.mxu0 0.0
  %94 = vmatpush2.msra.mxu0 0.0
  %95 = vmatprep.subr.mxu0 0.0
  %96 = vmatpush2.msra.mxu0 0.0
  %97 = vmatprep.subr.mxu0 0.0
  %98 = vmatpush2.msra.mxu0 0.0
  %99 = vmatprep.subr.mxu0 0.0
  %100 = vmatpush2.msra.mxu0 0.0
  %101 = vmatprep.subr.mxu0 0.0
  %102 = vmatpush2.msra.mxu0 0.0
  %103 = vmatprep.subr.mxu0 0.0
  %104 = vmatpush2.msra.mxu0 0.0
  %105 = vmatprep.subr.mxu0 0.0
  %106 = vmatpush2.msra.mxu0 0.0
  %107 = vmatprep.subr.mxu0 0.0
  %108 = vmatpush2.msra.mxu0 0.0
  %109 = vmatprep.subr.mxu0 0.0
  %110 = vmatpush2.msra.mxu0 0.0
  %111 = vmatprep.subr.mxu0 0.0
  %112 = vmatpush2.msra.mxu0 0.0
  %113 = vmatprep.subr.mxu0 0.0
  %114 = vmatpush2.msra.mxu0 0.0
  %115 = vmatprep.subr.mxu0 0.0
  %116 = vmatpush2.msra.mxu0 0.0
  %117 = vmatprep.mubr.f32.mxu0 0.0
  %118 = vmatmul.mubr.f32.gmra.mxu0 %v28
  %v119 = vpop.f32.mrf.mxu0
  %v120 = vadd.f32 %v51, %v119
  %v121 = vpop.f32.mrf.mxu0
  %122 = vmatprep.mubr.f32.mxu0 0.0
  %123 = vmatmul.mubr.f32.gmra.mxu0 %v29
  %v124 = vpop.f32.mrf.mxu0
  %v125 = vadd.f32 %v51, %v124
  %v126 = vpop.f32.mrf.mxu0
  %127 = vdwg.mxu0
  %v128 = vmax.f32 %v120, 0.0
  %v129 = vmax.f32 %v125, 0.0
  %v130 = vld [vmem:[%s3] sm:$0xff]
  %v131 = vld [vmem:[%s3 + $0x8] sm:$0xff]
  %v132 = vld [vmem:[%s3 + $0x10] sm:$0xff]
  %v133 = vld [vmem:[%s3 + $0x18] sm:$0xff]
  %v134 = vld [vmem:[%s3 + $0x20] sm:$0xff]
  %v135 = vld [vmem:[%s3 + $0x28] sm:$0xff]
  %v136 = vld [vmem:[%s3 + $0x30] sm:$0xff]
  %v137 = vld [vmem:[%s3 + $0x38] sm:$0xff]
  %v138 = vld [vmem:[%s4] sm:$0x1]
  %v140 = vlaneseq
  %v141 = vshrl.u32 %v140, 7
  %v142 = vsub.s32 0, %v141
  %v143 = vrot.slane %v138, %v142
  %vm145 = vcmask 523264
  %v147 = vsel %vm145, %v128, 0
  %v150 = vsel %vm145, %v129, 0
  %152 = vmatprep.subr.mxu0 0.0
  %153 = vmatpush1.msra.mxu0 0.0
  %154 = vmatprep.subr.mxu0 0.0
  %155 = vmatpush1.msra.mxu0 0.0
  %156 = vmatprep.subr.mxu0 0.0
  %157 = vmatpush1.msra.mxu0 0.0
  %158 = vmatprep.subr.mxu0 0.0
  %159 = vmatpush1.msra.mxu0 0.0
  %160 = vmatprep.subr.mxu0 0.0
  %161 = vmatpush1.msra.mxu0 0.0
  %162 = vmatprep.subr.mxu0 0.0
  %163 = vmatpush1.msra.mxu0 0.0
  %164 = vmatprep.subr.mxu0 0.0
  %165 = vmatpush1.msra.mxu0 0.0
  %166 = vmatprep.subr.mxu0 0.0
  %167 = vmatpush1.msra.mxu0 0.0
  %168 = vmatprep.subr.mxu0 0.0
  %169 = vmatpush1.msra.mxu0 %v137
  %170 = vmatprep.subr.mxu0 0.0
  %171 = vmatpush1.msra.mxu0 %v136
  %172 = vmatprep.subr.mxu0 0.0
  %173 = vmatpush1.msra.mxu0 %v135
  %174 = vmatprep.subr.mxu0 0.0
  %175 = vmatpush1.msra.mxu0 %v134
  %176 = vmatprep.subr.mxu0 0.0
  %177 = vmatpush1.msra.mxu0 %v133
  %178 = vmatprep.subr.mxu0 0.0
  %179 = vmatpush1.msra.mxu0 %v132
  %180 = vmatprep.subr.mxu0 0.0
  %181 = vmatpush1.msra.mxu0 %v131
  %182 = vmatprep.subr.mxu0 0.0
  %183 = vmatpush1.msra.mxu0 %v130
  %184 = vmatprep.subr.mxu0 0.0
  %185 = vmatpush2.msra.mxu0 0.0
  %186 = vmatprep.subr.mxu0 0.0
  %187 = vmatpush2.msra.mxu0 0.0
  %188 = vmatprep.subr.mxu0 0.0
  %189 = vmatpush2.msra.mxu0 0.0
  %190 = vmatprep.subr.mxu0 0.0
  %191 = vmatpush2.msra.mxu0 0.0
  %192 = vmatprep.subr.mxu0 0.0
  %193 = vmatpush2.msra.mxu0 0.0
  %194 = vmatprep.subr.mxu0 0.0
  %195 = vmatpush2.msra.mxu0 0.0
  %196 = vmatprep.subr.mxu0 0.0
  %197 = vmatpush2.msra.mxu0 0.0
  %198 = vmatprep.subr.mxu0 0.0
  %199 = vmatpush2.msra.mxu0 0.0
  %200 = vmatprep.subr.mxu0 0.0
  %201 = vmatpush2.msra.mxu0 0.0
  %202 = vmatprep.subr.mxu0 0.0
  %203 = vmatpush2.msra.mxu0 0.0
  %204 = vmatprep.subr.mxu0 0.0
  %205 = vmatpush2.msra.mxu0 0.0
  %206 = vmatprep.subr.mxu0 0.0
  %207 = vmatpush2.msra.mxu0 0.0
  %208 = vmatprep.subr.mxu0 0.0
  %209 = vmatpush2.msra.mxu0 0.0
  %210 = vmatprep.subr.mxu0 0.0
  %211 = vmatpush2.msra.mxu0 0.0
  %212 = vmatprep.subr.mxu0 0.0
  %213 = vmatpush2.msra.mxu0 0.0
  %214 = vmatprep.subr.mxu0 0.0
  %215 = vmatpush2.msra.mxu0 0.0
  %216 = vmatprep.mubr.f32.mxu0 0.0
  %217 = vmatmul.mubr.f32.gmra.mxu0 %v147
  %v218 = vpop.f32.mrf.mxu0
  %v219 = vadd.f32 %v143, %v218
  %v220 = vpop.f32.mrf.mxu0
  %221 = vmatprep.mubr.f32.mxu0 0.0
  %222 = vmatmul.mubr.f32.gmra.mxu0 %v150
  %v223 = vpop.f32.mrf.mxu0
  %v224 = vadd.f32 %v143, %v223
  %v225 = vpop.f32.mrf.mxu0
  %226 = vdwg.mxu0
  %v227 = vmax.f32 %v219, 0.0
  %v228 = vmax.f32 %v224, 0.0
  %v229 = vld [vmem:[%s5] sm:$0xff]
  %v230 = vld [vmem:[%s5 + $0x8] sm:$0xff]
  %v231 = vld [vmem:[%s5 + $0x10] sm:$0xff]
  %v232 = vld [vmem:[%s5 + $0x18] sm:$0xff]
  %v233 = vld [vmem:[#allocation2] sm:$0x1]
  %v235 = vlaneseq
  %v236 = vshrl.u32 %v235, 7
  %v237 = vsub.s32 0, %v236
  %v238 = vrot.slane %v233, %v237
  %vm240 = vcmask 261120
  %v242 = vsel %vm240, %v227, 0
  %v245 = vsel %vm240, %v228, 0
  %247 = vmatprep.subr.mxu0 0.0
  %248 = vmatpush1.msra.mxu0 0.0
  %249 = vmatprep.subr.mxu0 0.0
  %250 = vmatpush1.msra.mxu0 0.0
  %251 = vmatprep.subr.mxu0 0.0
  %252 = vmatpush1.msra.mxu0 0.0
  %253 = vmatprep.subr.mxu0 0.0
  %254 = vmatpush1.msra.mxu0 0.0
  %255 = vmatprep.subr.mxu0 0.0
  %256 = vmatpush1.msra.mxu0 0.0
  %257 = vmatprep.subr.mxu0 0.0
  %258 = vmatpush1.msra.mxu0 0.0
  %259 = vmatprep.subr.mxu0 0.0
  %260 = vmatpush1.msra.mxu0 0.0
  %261 = vmatprep.subr.mxu0 0.0
  %262 = vmatpush1.msra.mxu0 0.0
  %263 = vmatprep.subr.mxu0 0.0
  %264 = vmatpush1.msra.mxu0 0.0
  %265 = vmatprep.subr.mxu0 0.0
  %266 = vmatpush1.msra.mxu0 0.0
  %267 = vmatprep.subr.mxu0 0.0
  %268 = vmatpush1.msra.mxu0 0.0
  %269 = vmatprep.subr.mxu0 0.0
  %270 = vmatpush1.msra.mxu0 0.0
  %271 = vmatprep.subr.mxu0 0.0
  %272 = vmatpush1.msra.mxu0 %v232
  %273 = vmatprep.subr.mxu0 0.0
  %274 = vmatpush1.msra.mxu0 %v231
  %275 = vmatprep.subr.mxu0 0.0
  %276 = vmatpush1.msra.mxu0 %v230
  %277 = vmatprep.subr.mxu0 0.0
  %278 = vmatpush1.msra.mxu0 %v229
  %279 = vmatprep.subr.mxu0 0.0
  %280 = vmatpush2.msra.mxu0 0.0
  %281 = vmatprep.subr.mxu0 0.0
  %282 = vmatpush2.msra.mxu0 0.0
  %283 = vmatprep.subr.mxu0 0.0
  %284 = vmatpush2.msra.mxu0 0.0
  %285 = vmatprep.subr.mxu0 0.0
  %286 = vmatpush2.msra.mxu0 0.0
  %287 = vmatprep.subr.mxu0 0.0
  %288 = vmatpush2.msra.mxu0 0.0
  %289 = vmatprep.subr.mxu0 0.0
  %290 = vmatpush2.msra.mxu0 0.0
  %291 = vmatprep.subr.mxu0 0.0
  %292 = vmatpush2.msra.mxu0 0.0
  %293 = vmatprep.subr.mxu0 0.0
  %294 = vmatpush2.msra.mxu0 0.0
  %295 = vmatprep.subr.mxu0 0.0
  %296 = vmatpush2.msra.mxu0 0.0
  %297 = vmatprep.subr.mxu0 0.0
  %298 = vmatpush2.msra.mxu0 0.0
  %299 = vmatprep.subr.mxu0 0.0
  %300 = vmatpush2.msra.mxu0 0.0
  %301 = vmatprep.subr.mxu0 0.0
  %302 = vmatpush2.msra.mxu0 0.0
  %303 = vmatprep.subr.mxu0 0.0
  %304 = vmatpush2.msra.mxu0 0.0
  %305 = vmatprep.subr.mxu0 0.0
  %306 = vmatpush2.msra.mxu0 0.0
  %307 = vmatprep.subr.mxu0 0.0
  %308 = vmatpush2.msra.mxu0 0.0
  %309 = vmatprep.subr.mxu0 0.0
  %310 = vmatpush2.msra.mxu0 0.0
  %311 = vmatprep.mubr.f32.mxu0 0.0
  %312 = vmatmul.mubr.f32.gmra.mxu0 %v242
  %v313 = vpop.f32.mrf.mxu0
  %v314 = vadd.f32 %v238, %v313
  %v315 = vpop.f32.mrf.mxu0
  %316 = vmatprep.mubr.f32.mxu0 0.0
  %317 = vmatmul.mubr.f32.gmra.mxu0 %v245
  %v318 = vpop.f32.mrf.mxu0
  %v319 = vadd.f32 %v238, %v318
  %v320 = vpop.f32.mrf.mxu0
  %321 = vdwg.mxu0
  %v322 = vsub.f32 0.0, %v314
  %v323 = vsub.f32 0.0, %v319
  %v324 = vmul.f32 %v322, 1.442695
  %v325 = vpow.pop %v324
  %v326 = vmul.f32 %v323, 1.442695
  %v327 = vpow.pop %v326
  %v328 = vadd.f32 %v325, 1.0
  %v329 = vadd.f32 %v327, 1.0
  %v330 = vrcp.pop %v328
  %v331 = vmul.f32 1.0, %v330
  %v332 = vrcp.pop %v329
  %v333 = vmul.f32 1.0, %v332
  %vm334 = vcmask 7168
  %335 = vst.msk [vmem:[%s7] sm:$0xff] %vm334, %v331
  %336 = vst.msk [vmem:[%s7 + $0x8] sm:$0xff] %vm334, %v333
  // Predicated region
  $region30: #{tpu_custom_call.1} parent=0 // pred_check
    _
  $region31: #{tpu_custom_call.1} parent=0 // pred_check_branch
    %338 = sbr.rel (0) target = $region33
  $region32: #{tpu_custom_call.1} parent=0 // pred_region
    _
  $region33: #{tpu_custom_call.1} parent=0 // pred_fallthru
    _
  // Predicated region
  $region34: #{tpu_custom_call.1} parent=0 // pred_check
    _
  $region35: #{tpu_custom_call.1} parent=0 // pred_check_branch
    %340 = sbr.rel (0) target = $region37
  $region36: #{tpu_custom_call.1} parent=0 // pred_region
    _
  $region37: #{tpu_custom_call.1} parent=0 // pred_fallthru
    _

</llo_original>
